<compile_context>
chip_gen: v7x
topology: tpu7x:2x2x1
jax: 0.10.0
libtpu: 0.0.40
codegen_flags: <defaults>
</compile_context>

<pallas_src>
import functools

import jax
import jax.numpy as jnp
from jax.experimental import pallas as pl
from jax.experimental.pallas import tpu as pltpu


def _gem_kernel(p_ref, x_ref, o_ref, *, eps, inv_hw, bf16_transcendentals):
    """One row-tile of GeM pooling.

    p_ref: (1,) f32 exponent in SMEM.
    x_ref: (TM, HW) input tile in VMEM.
    o_ref: (TM, 1) pooled output tile in VMEM.
    """
    p = p_ref[0]
    inv_p = 1.0 / p  # scalar unit; hoisted off the per-element path

    # clamp(min=eps); do it in f32 so the clamp floor is exact.
    xc = jnp.maximum(x_ref[...].astype(jnp.float32), eps)

    # x ** p  via  exp(p * log(x))  (x > 0 after the clamp).
    if bf16_transcendentals:
        # bf16 EUP path (v6e/v7x): ~2x transcendental throughput when the
        # input is already bf16.  Row-sum accumulation stays in f32.
        xp = jnp.exp(p.astype(jnp.bfloat16) * jnp.log(xc.astype(jnp.bfloat16)))
        xp = xp.astype(jnp.float32)
    else:
        xp = jnp.exp(p * jnp.log(xc))

    # Global average pool over the spatial (lane) axis: sum * (1/HW), the
    # reciprocal of HW folded in at trace time (no per-row divide).
    mean = jnp.sum(xp, axis=-1, keepdims=True) * inv_hw  # (TM, 1), f32

    # mean ** (1/p)
    out = jnp.exp(jnp.log(mean) * inv_p)
    o_ref[...] = out.astype(o_ref.dtype)


def _round_up(v, m):
    return (v + m - 1) // m * m


def _choose_row_tile(nc, hw, target_bytes=2 * 1024 * 1024):
    """Rows per tile: ~2 MiB of f32 per input tile, multiple of 8, <= padded NC."""
    rows = max(8, target_bytes // (hw * 4))
    rows = max(8, (rows // 8) * 8)
    return min(rows, _round_up(nc, 8))


def gem_pool(x, p, eps=1e-6):
    """GeM pooling.  x: (N, C, H, W) -> (N, C, 1, 1), same dtype as x."""
    N, C, H, W = x.shape
    NC, HW = N * C, H * W

    tm = _choose_row_tile(NC, HW)
    nc_pad = _round_up(NC, tm)

    x2d = x.reshape(NC, HW)
    if nc_pad != NC:
        # Pad rows with 1.0 (positive -> finite math); padded rows are dropped.
        x2d = jnp.concatenate(
            [x2d, jnp.ones((nc_pad - NC, HW), dtype=x2d.dtype)], axis=0)

    # bf16 transcendentals only when the input itself is bf16 (v6e/v7x EUP
    # lever); f32 inputs keep f32 math (required on v5e, HBM-bound on v6e).
    bf16_transcendentals = x.dtype == jnp.bfloat16

    out2d = pl.pallas_call(
        functools.partial(
            _gem_kernel,
            eps=float(eps),
            inv_hw=1.0 / float(HW),
            bf16_transcendentals=bf16_transcendentals,
        ),
        out_shape=jax.ShapeDtypeStruct((nc_pad, 1), x.dtype),
        grid=(nc_pad // tm,),
        in_specs=[
            pl.BlockSpec(memory_space=pltpu.MemorySpace.SMEM),  # p (scalar)
            pl.BlockSpec((tm, HW), lambda i: (i, 0)),           # x row tile
        ],
        out_specs=pl.BlockSpec((tm, 1), lambda i: (i, 0)),
        compiler_params=pltpu.CompilerParams(
            # Shard row tiles across v7x's two TensorCores; no-op on v5e/v6e.
            dimension_semantics=("parallel",),
        ),
    )(p.astype(jnp.float32), x2d)

    return out2d[:NC].reshape(N, C, 1, 1)


if __name__ == "__main__":
    key = jax.random.PRNGKey(0)

    N, C, H, W = 2, 4, 16, 16
    x = jax.random.normal(key, (N, C, H, W), dtype=jnp.float32)

    # Deterministic parameter init, matching nn.Parameter(torch.ones(1) * 3).
    p = jnp.ones((1,), dtype=jnp.float32) * 3.0
    eps = 1e-6

    y = gem_pool(x, p, eps)
    jax.block_until_ready(y)

    # Pure-JAX reference for sanity.
    xc = jnp.maximum(x, eps)
    ref = jnp.mean(xc ** p[0], axis=(-2, -1), keepdims=True) ** (1.0 / p[0])
    assert y.shape == (N, C, 1, 1)
    assert jnp.allclose(y, ref, rtol=1e-5, atol=1e-5)

    print("KERNEL_OK")
</pallas_src>

<mosaic_0001>
module attributes {stable_mosaic.version = 11 : i64} {
  func.func @_gem_kernel(%arg0: i32, %arg1: memref<1xf32, #tpu.memory_space<smem>>, %arg2: memref<8x256xf32, #tpu.memory_space<vmem>>, %arg3: memref<8x1xf32, #tpu.memory_space<vmem>>) attributes {dimension_semantics = [#tpu.dimension_semantics<parallel>], iteration_bounds = array<i64: 1>, scalar_prefetch = 0 : i64, scratch_operands = 0 : i64, tpu.core_type = #tpu.core_type<tc>, window_params = [{transform_indices = @transform_0, window_bounds = array<i64: 1>}, {transform_indices = @transform_1, window_bounds = array<i64: 8, 256>}, {transform_indices = @transform_2, window_bounds = array<i64: 8, 1>}]} {
    %c0 = arith.constant 0 : index
    %0 = memref.load %arg1[%c0] : memref<1xf32, #tpu.memory_space<smem>>
    %cst = arith.constant 1.000000e+00 : f32
    %1 = arith.divf %cst, %0 : f32
    %c0_0 = arith.constant 0 : index
    %c0_1 = arith.constant 0 : index
    %2 = vector.load %arg2[%c0_0, %c0_1] : memref<8x256xf32, #tpu.memory_space<vmem>>, vector<8x256xf32>
    %cst_2 = arith.constant 9.99999997E-7 : f32
    %3 = vector.broadcast %cst_2 : f32 to vector<8x256xf32>
    %4 = arith.maximumf %2, %3 : vector<8x256xf32>
    %5 = math.log %4 : vector<8x256xf32>
    %6 = vector.broadcast %0 : f32 to vector<8x256xf32>
    %7 = arith.mulf %6, %5 : vector<8x256xf32>
    %8 = math.exp %7 : vector<8x256xf32>
    %cst_3 = arith.constant dense<0.000000e+00> : vector<8xf32>
    %9 = vector.multi_reduction <add>, %8, %cst_3 [1] : vector<8x256xf32> to vector<8xf32>
    %10 = vector.shape_cast %9 : vector<8xf32> to vector<8x1xf32>
    %cst_4 = arith.constant 3.906250e-03 : f32
    %11 = vector.broadcast %cst_4 : f32 to vector<8x1xf32>
    %12 = arith.mulf %10, %11 : vector<8x1xf32>
    %13 = math.log %12 : vector<8x1xf32>
    %14 = vector.broadcast %1 : f32 to vector<8x1xf32>
    %15 = arith.mulf %13, %14 : vector<8x1xf32>
    %16 = math.exp %15 : vector<8x1xf32>
    %c0_5 = arith.constant 0 : index
    %c0_6 = arith.constant 0 : index
    %17 = vector.load %arg3[%c0_5, %c0_6] : memref<8x1xf32, #tpu.memory_space<vmem>>, vector<8x1xf32>
    tpu.vector_store %arg3[%c0_5, %c0_6], %16 {strides = array<i32>} : memref<8x1xf32, #tpu.memory_space<vmem>>, vector<8x1xf32>,
    return
  }
  func.func @transform_0(%arg0: i32) -> i32 {
    %c0_i32 = arith.constant 0 : i32
    %c0_i32_0 = arith.constant 0 : i32
    return %c0_i32 : i32
  }
  func.func @transform_1(%arg0: i32) -> (i32, i32) {
    %c0_i32 = arith.constant 0 : i32
    %c0_i32_0 = arith.constant 0 : i32
    return %arg0, %c0_i32 : i32, i32
  }
  func.func @transform_2(%arg0: i32) -> (i32, i32) {
    %c0_i32 = arith.constant 0 : i32
    %c0_i32_0 = arith.constant 0 : i32
    return %arg0, %c0_i32 : i32, i32
  }
}

</mosaic_0001>

<llo_original>
// kernel: tpu_custom_call.1
$region0: #{tpu_custom_call.1}
  #allocation0 [shape = 'u32[]', space=smem, size = 0x4, offset = 0x4, fixed_abs, tag = 'smem constant byte address 0x4 - core index']
  #allocation1 [shape = 'u32[144,128]{1,0:T(1,128)}', space=vmem, size = 0x12000, scoped, tag = 'internal scratch']
  #allocation2 [shape = 'f32[1]{0:T(128)S(6)}', space=smem, size = 0x200, scoped, tag = 'scoped memory for tpu_custom_call.1']
  %s0 = inlined_call_operand.<no memory space> [shape: f32[1], index: 0, kind: input, shape index: {}]
  %s1 = inlined_call_operand.hbm [shape: f32[8,256], index: 1, kind: input, shape index: {}]
  %s2 = inlined_call_operand.vmem [shape: f32[8,1], index: 2, kind: output, shape index: {}]
  %s3 = sld [smem:[#allocation0]]
  $region22: #{tpu_custom_call.1} parent=0
    _
  %s5 = ssub.s32 1, %s3
  %s6 = scalar_select 0, %s5, %s3
  %7 = sst [smem:[#allocation2]] %s0
  $region1: #{tpu_custom_call.1} parent=0
    #allocation3 [shape = 'u8[8192]{0}', space=vmem, size = 0x2000, scoped, tag = 'input window, operand 1, single buffered']
    #allocation4 [shape = 's32[1]{0}', space=sflag, size = 0x4, scoped, tag = 'scoped memory for tpu_custom_call.1']
    %8 = vsyncpa [#allocation4], 0
    // Predicated region
    $region2: #{tpu_custom_call.1} parent=1 // pred_check
      _
    $region3: #{tpu_custom_call.1} parent=1 // pred_check_branch
      %10 = sbr.rel (0) target = $region5
    $region4: #{tpu_custom_call.1} parent=1 // pred_region
      _
    $region5: #{tpu_custom_call.1} parent=1 // pred_fallthru
      _
    // Predicated region
    $region6: #{tpu_custom_call.1} parent=1 // pred_check
      _
    $region7: #{tpu_custom_call.1} parent=1 // pred_check_branch
      %12 = sbr.rel (0) target = $region9
    $region8: #{tpu_custom_call.1} parent=1 // pred_region
      %s14 = ssub.s32 256, 256
      %15 = vsyncadd [#allocation4], %s14
      %s17 = sshll.u32 [#allocation3], 4
      %s18 = int_to_ptr.vmem [resolvable:$true] %s17
      %20 = dma.hbm_to_vmem [thread:$0]  %s1, 256, %s18, [#allocation4]
    $region9: #{tpu_custom_call.1} parent=1 // pred_fallthru
      _
    // Predicated region
    $region10: #{tpu_custom_call.1} parent=1 // pred_check
      _
    $region11: #{tpu_custom_call.1} parent=1 // pred_check_branch
      %22 = sbr.rel (0) target = $region13
    $region12: #{tpu_custom_call.1} parent=1 // pred_region
      %23 = dma.done [#allocation4], 256
    $region13: #{tpu_custom_call.1} parent=1 // pred_fallthru
      _
    %s24 = sld [smem:[#allocation2]]
    %v25 = vstv %s24
    %v26 = vrcp.pop %v25
    %s27 = vtos %v26
    %v28 = vld [vmem:[#allocation3] sm:$0xff]
    %v29 = vld [vmem:[#allocation3 + $0x8] sm:$0xff]
    %v30 = vmax.f32 %v28, 1e-06
    %v31 = vmax.f32 %v29, 1e-06
    %v32 = vlog2.pop %v30
    %v33 = vmul.f32 %v32, 0.6931472
    %v34 = vlog2.pop %v31
    %v35 = vmul.f32 %v34, 0.6931472
    %v36 = vstv %s24
    %v37 = vmul.f32 %v36, %v33
    %v38 = vmul.f32 %v36, %v35
    %v39 = vmul.f32 %v37, 1.442695
    %v40 = vpow.pop %v39
    %v41 = vmul.f32 %v38, 1.442695
    %v42 = vpow.pop %v41
    %v43 = vadd.f32 %v40, %v42
    %44 = vadd.xlane.f32.xlu0 %v43
    %v45 = vpop.xlane.xlu0 %44
    %v46 = vmul.f32 %v45, 0.00390625
    %v47 = vlog2.pop %v46
    %v48 = vmul.f32 %v47, 0.6931472
    %v49 = vstv %s27
    %v50 = vmul.f32 %v48, %v49
    %v51 = vmul.f32 %v50, 1.442695
    %v52 = vpow.pop %v51
    %vm53 = vcmask 7168
    %54 = vst.msk [vmem:[%s2] sm:$0xff] %vm53, %v52
    // Predicated region
    $region14: #{tpu_custom_call.1} parent=1 // pred_check
      _
    $region15: #{tpu_custom_call.1} parent=1 // pred_check_branch
      %56 = sbr.rel (0) target = $region17
    $region16: #{tpu_custom_call.1} parent=1 // pred_region
      _
    $region17: #{tpu_custom_call.1} parent=1 // pred_fallthru
      _
    // Predicated region
    $region18: #{tpu_custom_call.1} parent=1 // pred_check
      _
    $region19: #{tpu_custom_call.1} parent=1 // pred_check_branch
      %58 = sbr.rel (0) target = $region21
    $region20: #{tpu_custom_call.1} parent=1 // pred_region
      _
    $region21: #{tpu_custom_call.1} parent=1 // pred_fallthru
      _
    %59 = vsyncpa [#allocation4], 1

</llo_original>
